<compile_context>
chip_gen: v5e
topology: v5e:2x2
jax: 0.10.0
libtpu: 0.0.40
codegen_flags: <defaults>
</compile_context>

<pallas_src>
import math

import jax
import jax.numpy as jnp
from jax.experimental import pallas as pl
from jax.experimental.pallas import tpu as pltpu

MAX_PERIOD = 10000.0


def _timestep_kernel(steps_ref, freqs_ref, out_ref):
    # steps_ref: (TB, 1)    f32  (batch on sublanes)
    # freqs_ref: (1, half)  f32  (constant table, sublane-broadcast)
    # out_ref:   (TB, 2*half)    out_dtype
    arg = steps_ref[...] * freqs_ref[...]                          # (TB, half)
    emb = jnp.concatenate([jnp.cos(arg), jnp.sin(arg)], axis=-1)   # (TB, 2*half)
    # Single full-tile store (unmasked / lane-dense whenever half % 128 == 0).
    out_ref[...] = emb.astype(out_ref.dtype)


def _round_up(x: int, m: int) -> int:
    return ((x + m - 1) // m) * m


def timestep_embedding(
    timesteps: jax.Array,
    time_emb_dim: int,
    *,
    out_dtype=jnp.float32,
    block_b: int = 512,
) -> jax.Array:
    """Equivalent of Timestep(time_emb_dim)(timesteps) in the PyTorch module.

    Set out_dtype=jnp.bfloat16 when the downstream time-embedding MLP consumes
    bf16: it halves the HBM writeback, which dominates this kernel's cost.
    """
    assert timesteps.ndim == 1, "timesteps must be 1-D"
    assert time_emb_dim >= 2, "time_emb_dim must be >= 2"
    b = timesteps.shape[0]
    half = time_emb_dim // 2

    # Batch tile: multiple of 8 (f32 sublane). For b >= 16, force >= 2 grid
    # programs so the "parallel" batch axis actually shards across the two
    # v7x TensorCores (harmless on single-TC v5e/v6e). block_b=512 keeps the
    # double-buffered output block well under v7x's 64 MiB VMEM for any
    # realistic emb_dim (<= a few MiB); v5e/v6e could go much larger.
    if b >= 16:
        tb = min(_round_up(block_b, 8), _round_up(pl.cdiv(b, 2), 8))
    else:
        tb = 8
    grid = (pl.cdiv(b, tb),)   # ragged last block: no pad, no out[:b] copy.

    steps_2d = timesteps.astype(jnp.float32).reshape(b, 1)

    # Constant frequency table: exp(-log(max_period) * j / half), j in [0, half).
    freqs = jnp.exp(
        (-math.log(MAX_PERIOD) / half) * jnp.arange(half, dtype=jnp.float32)
    ).reshape(1, half)

    out_itemsize = jnp.dtype(out_dtype).itemsize
    cost = pl.CostEstimate(
        flops=b * half,                      # the steps*freqs multiply
        transcendentals=2 * b * half,        # cos + sin
        bytes_accessed=b * 4 + half * 4 + b * 2 * half * out_itemsize,
    )

    out = pl.pallas_call(
        _timestep_kernel,
        out_shape=jax.ShapeDtypeStruct((b, 2 * half), out_dtype),
        grid_spec=pltpu.PrefetchScalarGridSpec(
            num_scalar_prefetch=0,
            grid=grid,
            in_specs=[
                pl.BlockSpec((tb, 1), lambda i: (i, 0)),     # timesteps
                pl.BlockSpec((1, half), lambda i: (0, 0)),   # freqs (reused)
            ],
            out_specs=pl.BlockSpec((tb, 2 * half), lambda i: (i, 0)),
        ),
        compiler_params=pltpu.CompilerParams(
            # Shards the batch axis across the 2 TensorCores on v7x;
            # harmless (single TC) on v5e / v6e.
            dimension_semantics=("parallel",),
        ),
        cost_estimate=cost,
    )(steps_2d, freqs)

    if time_emb_dim % 2 == 1:
        # Rare odd-dim path: single zero column on the right, matching
        # torch F.pad(emb, (0, 1)). Dead code for the common even dims.
        out = jnp.pad(out, ((0, 0), (0, 1)))
    return out


def _reference(timesteps: jax.Array, time_emb_dim: int) -> jax.Array:
    half = time_emb_dim // 2
    freqs = jnp.exp(
        -math.log(MAX_PERIOD) * jnp.arange(half, dtype=jnp.float32) / half
    )
    emb = timesteps.astype(jnp.float32)[:, None] * freqs[None, :]
    emb = jnp.concatenate([jnp.cos(emb), jnp.sin(emb)], axis=-1)
    if time_emb_dim % 2 == 1:
        emb = jnp.pad(emb, ((0, 0), (0, 1)))
    return emb


if __name__ == "__main__":
    key = jax.random.PRNGKey(0)

    # 1) Small demo shape consistent with a diffusion timestep embedding.
    batch, time_emb_dim = 8, 32
    timesteps = jax.random.randint(key, (batch,), 0, 1000).astype(jnp.float32)
    out = jax.block_until_ready(timestep_embedding(timesteps, time_emb_dim))
    ref = _reference(timesteps, time_emb_dim)
    assert out.shape == (batch, time_emb_dim), out.shape
    assert out.dtype == jnp.float32
    assert jnp.allclose(out, ref, atol=1e-5, rtol=1e-5), (
        float(jnp.max(jnp.abs(out - ref)))
    )

    # 2) Ragged-grid path: grid > 1 and B not a tile multiple (no pad/slice).
    b2 = 20
    t2 = jax.random.randint(jax.random.PRNGKey(1), (b2,), 0, 1000).astype(
        jnp.float32
    )
    out2 = jax.block_until_ready(timestep_embedding(t2, time_emb_dim, block_b=8))
    ref2 = _reference(t2, time_emb_dim)
    assert out2.shape == (b2, time_emb_dim), out2.shape
    assert jnp.allclose(out2, ref2, atol=1e-5, rtol=1e-5), (
        float(jnp.max(jnp.abs(out2 - ref2)))
    )

    # 3) Lane-aligned dim (half == 128) with b >= 16 -> 2 grid programs
    #    (exercises the v7x two-TensorCore split; lane-dense single store).
    b3, d3 = 16, 256
    t3 = jax.random.randint(jax.random.PRNGKey(2), (b3,), 0, 1000).astype(
        jnp.float32
    )
    out3 = jax.block_until_ready(timestep_embedding(t3, d3))
    ref3 = _reference(t3, d3)
    assert out3.shape == (b3, d3), out3.shape
    assert jnp.allclose(out3, ref3, atol=1e-5, rtol=1e-5), (
        float(jnp.max(jnp.abs(out3 - ref3)))
    )

    # 4) bf16 output path (halved HBM writeback for bf16 consumers).
    out4 = jax.block_until_ready(
        timestep_embedding(t3, d3, out_dtype=jnp.bfloat16)
    )
    assert out4.dtype == jnp.bfloat16
    assert jnp.allclose(out4.astype(jnp.float32), ref3, atol=1e-2), (
        float(jnp.max(jnp.abs(out4.astype(jnp.float32) - ref3)))
    )

    print("KERNEL_OK")
</pallas_src>

<mosaic_0001>
module attributes {stable_mosaic.version = 11 : i64} {
  func.func @_timestep_kernel(%arg0: i32, %arg1: memref<8x1xf32, #tpu.memory_space<vmem>>, %arg2: memref<1x16xf32, #tpu.memory_space<vmem>>, %arg3: memref<8x32xf32, #tpu.memory_space<vmem>>) attributes {dimension_semantics = [#tpu.dimension_semantics<parallel>], iteration_bounds = array<i64: 1>, scalar_prefetch = 0 : i64, scratch_operands = 0 : i64, tpu.core_type = #tpu.core_type<tc>, window_params = [{transform_indices = @transform_0, window_bounds = array<i64: 8, 1>}, {pipeline_mode = #tpu.pipeline_mode<synchronous>, transform_indices = @transform_1, window_bounds = array<i64: 1, 16>}, {transform_indices = @transform_2, window_bounds = array<i64: 8, 32>}]} {
    %c0 = arith.constant 0 : index
    %c0_0 = arith.constant 0 : index
    %0 = vector.load %arg1[%c0, %c0_0] : memref<8x1xf32, #tpu.memory_space<vmem>>, vector<8x1xf32>
    %c0_1 = arith.constant 0 : index
    %c0_2 = arith.constant 0 : index
    %1 = vector.load %arg2[%c0_1, %c0_2] : memref<1x16xf32, #tpu.memory_space<vmem>>, vector<1x16xf32>
    %2 = vector.broadcast %0 : vector<8x1xf32> to vector<8x16xf32>
    %3 = vector.broadcast %1 : vector<1x16xf32> to vector<8x16xf32>
    %4 = arith.mulf %2, %3 : vector<8x16xf32>
    %5 = math.cos %4 : vector<8x16xf32>
    %6 = math.sin %4 : vector<8x16xf32>
    %7 = tpu.concatenate %5, %6 in 1 : vector<8x16xf32>, vector<8x16xf32> -> vector<8x32xf32>
    %c0_3 = arith.constant 0 : index
    %c0_4 = arith.constant 0 : index
    %8 = vector.load %arg3[%c0_3, %c0_4] : memref<8x32xf32, #tpu.memory_space<vmem>>, vector<8x32xf32>
    tpu.vector_store %arg3[%c0_3, %c0_4], %7 {strides = array<i32>} : memref<8x32xf32, #tpu.memory_space<vmem>>, vector<8x32xf32>,
    return
  }
  func.func @transform_0(%arg0: i32) -> (i32, i32) {
    %c0_i32 = arith.constant 0 : i32
    %c0_i32_0 = arith.constant 0 : i32
    return %arg0, %c0_i32 : i32, i32
  }
  func.func @transform_1(%arg0: i32) -> (i32, i32) {
    %c0_i32 = arith.constant 0 : i32
    %c0_i32_0 = arith.constant 0 : i32
    %c0_i32_1 = arith.constant 0 : i32
    return %c0_i32, %c0_i32_0 : i32, i32
  }
  func.func @transform_2(%arg0: i32) -> (i32, i32) {
    %c0_i32 = arith.constant 0 : i32
    %c0_i32_0 = arith.constant 0 : i32
    return %arg0, %c0_i32 : i32, i32
  }
}

</mosaic_0001>

<llo_original>
// kernel: tpu_custom_call.1
$region0: #{tpu_custom_call.1}
  #allocation0 [shape = 'u32[]', space=smem, size = 0x4, offset = 0x4, fixed_abs, tag = 'smem constant byte address 0x4 - core index']
  #allocation1 [shape = 'u32[72,128]{1,0:T(1,128)}', space=vmem, size = 0x9000, scoped, tag = 'internal scratch']
  %s0 = inlined_call_operand.vmem [shape: f32[8,1], index: 0, kind: input, shape index: {}]
  %s1 = inlined_call_operand.vmem [shape: f32[1,16], index: 1, kind: input, shape index: {}]
  %s2 = inlined_call_operand.hbm [shape: f32[8,32], index: 2, kind: output, shape index: {}]
  %s3 = sld [smem:[#allocation0]]
  $region18: #{tpu_custom_call.1} parent=0
    _
  %s5 = ssub.s32 1, %s3
  %s6 = scalar_select 0, %s5, %s3
  $region1: #{tpu_custom_call.1} parent=0
    #allocation2 [shape = 'u8[4096]{0}', space=vmem, size = 0x1000, scoped, tag = 'output window, operand 0, single buffered']
    #allocation3 [shape = 's32[1]{0}', space=sflag, size = 0x4, scoped, tag = 'scoped memory for tpu_custom_call.1']
    %7 = vsyncpa [#allocation3], 0
    // Predicated region
    $region2: #{tpu_custom_call.1} parent=1 // pred_check
      _
    $region3: #{tpu_custom_call.1} parent=1 // pred_check_branch
      %9 = sbr.rel (0) target = $region5
    $region4: #{tpu_custom_call.1} parent=1 // pred_region
      _
    $region5: #{tpu_custom_call.1} parent=1 // pred_fallthru
      _
    // Predicated region
    $region6: #{tpu_custom_call.1} parent=1 // pred_check
      _
    $region7: #{tpu_custom_call.1} parent=1 // pred_check_branch
      %11 = sbr.rel (0) target = $region9
    $region8: #{tpu_custom_call.1} parent=1 // pred_region
      _
    $region9: #{tpu_custom_call.1} parent=1 // pred_fallthru
      _
    %v12 = vld [vmem:[%s0] sm:$0xff]
    %v13 = vld [vmem:[%s1] sm:$0x1]
    %15 = vset.pattern.permute.xlu0 0
    %16 = vperm.xlu0 %15, %v12
    %v17 = vpop.permute.xlu0 %16
    %v20 = vperm.slane %v13, 0
    %v22 = vmul.f32 %v17, %v20
    %v23 = vand.u32 2147483647, %v22
    %vm24 = vcmp.le.f32.partialorder %v23, 0.7853982
    %vm25 = vcmp.lt.s32.totalorder %v22, 0
    %v26 = vand.u32 %v22, 2139095040
    %v27 = vshrl.u32 %v26, 23
    %v28 = vsub.s32 %v27, 127
    %v29 = vand.u32 2147483647, %v22
    %v30 = vand.u32 %v29, 8388607
    %v31 = vor.u32 %v30, 8388608
    %v32 = vsub.s32 0, %v31
    %v33 = vadd.s32 %v28, 1
    %vm34 = vcmp.gt.s32.totalorder %v33, 0
    %v35 = vsel %vm34, %v33, 0
    %v36 = vshrl.u32 %v35, 5
    %v37 = vand.u32 %v35, 31
    %v38 = vsub.s32 32, %v37
    %v39 = vshrl.u32 683565275, %v38
    %v40 = vshll.u32 683565275, %v37
    %v41 = vshrl.u32 2475754826, %v38
    %v42 = vor.u32 %v40, %v41
    %v43 = vshll.u32 2475754826, %v37
    %v44 = vshrl.u32 2131351028, %v38
    %v45 = vor.u32 %v43, %v44
    %v46 = vshll.u32 2131351028, %v37
    %v47 = vshrl.u32 2102212464, %v38
    %v48 = vor.u32 %v46, %v47
    %v49 = vshll.u32 2102212464, %v37
    %v50 = vshrl.u32 920167782, %v38
    %v51 = vor.u32 %v49, %v50
    %v52 = vshll.u32 920167782, %v37
    %v53 = vshrl.u32 1326507024, %v38
    %v54 = vor.u32 %v52, %v53
    %vm55 = vcmp.lt.s32.totalorder %v36, 1
    %vm56 = vcmp.lt.s32.totalorder %v36, 2
    %vm57 = vcmp.lt.s32.totalorder %v36, 3
    %vm58 = vcmp.lt.s32.totalorder %v36, 4
    %v59 = vsel %vm55, %v39, %v42
    %v60 = vsel %vm58, %v48, 2102212464
    %v61 = vsel %vm57, %v45, %v60
    %v62 = vsel %vm56, %v59, %v61
    %v63 = vsel %vm55, %v42, %v45
    %v64 = vsel %vm58, %v51, 920167782
    %v65 = vsel %vm57, %v48, %v64
    %v66 = vsel %vm56, %v63, %v65
    %v67 = vsel %vm55, %v45, %v48
    %v68 = vsel %vm58, %v54, 1326507024
    %v69 = vsel %vm57, %v51, %v68
    %v70 = vsel %vm56, %v67, %v69
    %v71 = vshll.u32 %v31, 8
    %v72 = vand.u32 %v71, 65535
    %v73 = vshrl.u32 %v71, 16
    %v74 = vand.u32 %v70, 65535
    %v75 = vshrl.u32 %v70, 16
    %v76 = vmul.u32 %v72, %v74
    %v77 = vmul.u32 %v72, %v75
    %v78 = vmul.u32 %v73, %v74
    %v79 = vmul.u32 %v73, %v75
    %v80 = vshll.u32 %v77, 16
    %v81 = vshrl.u32 %v77, 16
    %v82 = vshll.u32 %v78, 16
    %v83 = vshrl.u32 %v78, 16
    %vm84 = vc.u32 %v76, %v80
    %v85 = vsel %vm84, 1, 0
    %v86 = vadd.s32 %v76, %v80
    %v87 = vadd.s32 %v79, %v85
    %vm88 = vc.u32 %v86, %v82
    %v89 = vsel %vm88, 1, 0
    %v90 = vadd.s32 %v86, %v82
    %v91 = vadd.s32 %v87, %v89
    %v92 = vadd.s32 %v91, %v81
    %v93 = vadd.s32 %v92, %v83
    %v94 = vand.u32 %v71, 65535
    %v95 = vshrl.u32 %v71, 16
    %v96 = vand.u32 %v66, 65535
    %v97 = vshrl.u32 %v66, 16
    %v98 = vmul.u32 %v94, %v96
    %v99 = vmul.u32 %v94, %v97
    %v100 = vmul.u32 %v95, %v96
    %v101 = vmul.u32 %v95, %v97
    %v102 = vshll.u32 %v99, 16
    %v103 = vshrl.u32 %v99, 16
    %v104 = vshll.u32 %v100, 16
    %v105 = vshrl.u32 %v100, 16
    %vm106 = vc.u32 %v98, %v102
    %v107 = vsel %vm106, 1, 0
    %v108 = vadd.s32 %v98, %v102
    %v109 = vadd.s32 %v101, %v107
    %vm110 = vc.u32 %v108, %v104
    %v111 = vsel %vm110, 1, 0
    %v112 = vadd.s32 %v108, %v104
    %v113 = vadd.s32 %v109, %v111
    %v114 = vadd.s32 %v113, %v103
    %v115 = vadd.s32 %v114, %v105
    %v116 = vmul.u32 %v71, %v62
    %v117 = vadd.s32 %v93, %v112
    %vm118 = vc.u32 %v93, %v112
    %v119 = vadd.s32 %v115, 1
    %v120 = vsel %vm118, %v119, %v115
    %v121 = vadd.s32 %v116, %v120
    %v122 = vadd.s32 %v121, 536870912
    %v123 = vshrl.u32 %v122, 30
    %v124 = vshll.u32 %v123, 30
    %v125 = vsub.s32 %v121, %v124
    %vm126 = vcmp.lt.s32.totalorder %v125, 0
    %v127 = vsub.s32 0, %v125
    %v128 = vsel %vm126, %v127, %v125
    %v129 = vclz %v128
    %v130 = vsub.s32 %v129, 2
    %vm131 = vcmp.gt.s32.totalorder 0, %v130
    %v132 = vsel %vm131, 0, %v130
    %v133 = vsub.s32 32, %v132
    %v134 = vshll.u32 %v125, %v132
    %v135 = vshrl.u32 %v117, %v133
    %v136 = vor.u32 %v134, %v135
    %v137 = vsub.s32 4294967266, %v132
    %v138 = vadd.s32 %v137, 127
    %v139 = vshll.u32 %v138, 23
    %v140 = vor.u32 4788187, %v139
    %v141 = vand.u32 2147483647, %v140
    %v143 = vcvt.s32.f32 %v136
    %v144 = vmul.f32 %v143, %v141
    %v145 = vxor.u32 %v144, 2147483648
    %v146 = vsel %vm25, %v145, %v144
    %v147 = vsub.s32 4, %v123
    %v148 = vsel %vm25, %v147, %v123
    %v149 = vsel %vm24, %v22, %v146
    %v150 = vsel %vm24, 0, %v148
    %v151 = vmul.f32 %v149, %v149
    %v152 = vmul.f32 %v151, -0.001358992
    %v153 = vadd.f32 %v152, 0.041655596
    %v154 = vmul.f32 %v151, %v153
    %v155 = vadd.f32 %v154, -0.4999988
    %v156 = vmul.f32 %v151, %v155
    %v157 = vadd.f32 1.0, %v156
    %v158 = vmul.f32 %v149, %v149
    %v159 = vmul.f32 %v158, -0.00019511016
    %v160 = vadd.f32 %v159, 0.008332121
    %v161 = vmul.f32 %v158, %v160
    %v162 = vadd.f32 %v161, -0.16666654
    %v163 = vmul.f32 %v158, %v162
    %v164 = vadd.f32 %v163, 1.0
    %v165 = vmul.f32 %v164, %v149
    %vm166 = vweird.f32 %v22
    %v167 = vand.u32 %v150, 3
    %vm168 = vcmp.lt.s32.totalorder %v167, 2
    %vm169 = vcmp.eq.s32.totalorder %v167, 0
    %v170 = vxor.u32 %v165, 2147483648
    %v171 = vsel %vm169, %v157, %v170
    %vm172 = vcmp.eq.s32.totalorder %v167, 2
    %v173 = vxor.u32 %v157, 2147483648
    %v174 = vsel %vm172, %v173, %v165
    %v175 = vsel %vm168, %v171, %v174
    %v176 = vsel %vm166, nan, %v175
    %v177 = vand.u32 2147483647, %v22
    %vm178 = vcmp.le.f32.partialorder %v177, 0.7853982
    %vm179 = vcmp.lt.s32.totalorder %v22, 0
    %v180 = vand.u32 %v22, 2139095040
    %v181 = vshrl.u32 %v180, 23
    %v182 = vsub.s32 %v181, 127
    %v183 = vand.u32 2147483647, %v22
    %v184 = vand.u32 %v183, 8388607
    %v185 = vor.u32 %v184, 8388608
    %v186 = vsub.s32 0, %v185
    %v187 = vadd.s32 %v182, 1
    %vm188 = vcmp.gt.s32.totalorder %v187, 0
    %v189 = vsel %vm188, %v187, 0
    %v190 = vshrl.u32 %v189, 5
    %v191 = vand.u32 %v189, 31
    %v192 = vsub.s32 32, %v191
    %v193 = vshrl.u32 683565275, %v192
    %v194 = vshll.u32 683565275, %v191
    %v195 = vshrl.u32 2475754826, %v192
    %v196 = vor.u32 %v194, %v195
    %v197 = vshll.u32 2475754826, %v191
    %v198 = vshrl.u32 2131351028, %v192
    %v199 = vor.u32 %v197, %v198
    %v200 = vshll.u32 2131351028, %v191
    %v201 = vshrl.u32 2102212464, %v192
    %v202 = vor.u32 %v200, %v201
    %v203 = vshll.u32 2102212464, %v191
    %v204 = vshrl.u32 920167782, %v192
    %v205 = vor.u32 %v203, %v204
    %v206 = vshll.u32 920167782, %v191
    %v207 = vshrl.u32 1326507024, %v192
    %v208 = vor.u32 %v206, %v207
    %vm209 = vcmp.lt.s32.totalorder %v190, 1
    %vm210 = vcmp.lt.s32.totalorder %v190, 2
    %vm211 = vcmp.lt.s32.totalorder %v190, 3
    %vm212 = vcmp.lt.s32.totalorder %v190, 4
    %v213 = vsel %vm209, %v193, %v196
    %v214 = vsel %vm212, %v202, 2102212464
    %v215 = vsel %vm211, %v199, %v214
    %v216 = vsel %vm210, %v213, %v215
    %v217 = vsel %vm209, %v196, %v199
    %v218 = vsel %vm212, %v205, 920167782
    %v219 = vsel %vm211, %v202, %v218
    %v220 = vsel %vm210, %v217, %v219
    %v221 = vsel %vm209, %v199, %v202
    %v222 = vsel %vm212, %v208, 1326507024
    %v223 = vsel %vm211, %v205, %v222
    %v224 = vsel %vm210, %v221, %v223
    %v225 = vshll.u32 %v185, 8
    %v226 = vand.u32 %v225, 65535
    %v227 = vshrl.u32 %v225, 16
    %v228 = vand.u32 %v224, 65535
    %v229 = vshrl.u32 %v224, 16
    %v230 = vmul.u32 %v226, %v228
    %v231 = vmul.u32 %v226, %v229
    %v232 = vmul.u32 %v227, %v228
    %v233 = vmul.u32 %v227, %v229
    %v234 = vshll.u32 %v231, 16
    %v235 = vshrl.u32 %v231, 16
    %v236 = vshll.u32 %v232, 16
    %v237 = vshrl.u32 %v232, 16
    %vm238 = vc.u32 %v230, %v234
    %v239 = vsel %vm238, 1, 0
    %v240 = vadd.s32 %v230, %v234
    %v241 = vadd.s32 %v233, %v239
    %vm242 = vc.u32 %v240, %v236
    %v243 = vsel %vm242, 1, 0
    %v244 = vadd.s32 %v240, %v236
    %v245 = vadd.s32 %v241, %v243
    %v246 = vadd.s32 %v245, %v235
    %v247 = vadd.s32 %v246, %v237
    %v248 = vand.u32 %v225, 65535
    %v249 = vshrl.u32 %v225, 16
    %v250 = vand.u32 %v220, 65535
    %v251 = vshrl.u32 %v220, 16
    %v252 = vmul.u32 %v248, %v250
    %v253 = vmul.u32 %v248, %v251
    %v254 = vmul.u32 %v249, %v250
    %v255 = vmul.u32 %v249, %v251
    %v256 = vshll.u32 %v253, 16
    %v257 = vshrl.u32 %v253, 16
    %v258 = vshll.u32 %v254, 16
    %v259 = vshrl.u32 %v254, 16
    %vm260 = vc.u32 %v252, %v256
    %v261 = vsel %vm260, 1, 0
    %v262 = vadd.s32 %v252, %v256
    %v263 = vadd.s32 %v255, %v261
    %vm264 = vc.u32 %v262, %v258
    %v265 = vsel %vm264, 1, 0
    %v266 = vadd.s32 %v262, %v258
    %v267 = vadd.s32 %v263, %v265
    %v268 = vadd.s32 %v267, %v257
    %v269 = vadd.s32 %v268, %v259
    %v270 = vmul.u32 %v225, %v216
    %v271 = vadd.s32 %v247, %v266
    %vm272 = vc.u32 %v247, %v266
    %v273 = vadd.s32 %v269, 1
    %v274 = vsel %vm272, %v273, %v269
    %v275 = vadd.s32 %v270, %v274
    %v276 = vadd.s32 %v275, 536870912
    %v277 = vshrl.u32 %v276, 30
    %v278 = vshll.u32 %v277, 30
    %v279 = vsub.s32 %v275, %v278
    %vm280 = vcmp.lt.s32.totalorder %v279, 0
    %v281 = vsub.s32 0, %v279
    %v282 = vsel %vm280, %v281, %v279
    %v283 = vclz %v282
    %v284 = vsub.s32 %v283, 2
    %vm285 = vcmp.gt.s32.totalorder 0, %v284
    %v286 = vsel %vm285, 0, %v284
    %v287 = vsub.s32 32, %v286
    %v288 = vshll.u32 %v279, %v286
    %v289 = vshrl.u32 %v271, %v287
    %v290 = vor.u32 %v288, %v289
    %v291 = vsub.s32 4294967266, %v286
    %v292 = vadd.s32 %v291, 127
    %v293 = vshll.u32 %v292, 23
    %v294 = vor.u32 4788187, %v293
    %v295 = vand.u32 2147483647, %v294
    %v297 = vcvt.s32.f32 %v290
    %v298 = vmul.f32 %v297, %v295
    %v299 = vxor.u32 %v298, 2147483648
    %v300 = vsel %vm179, %v299, %v298
    %v301 = vsub.s32 4, %v277
    %v302 = vsel %vm179, %v301, %v277
    %v303 = vsel %vm178, %v22, %v300
    %v304 = vsel %vm178, 0, %v302
    %v305 = vmul.f32 %v303, %v303
    %v306 = vmul.f32 %v305, -0.001358992
    %v307 = vadd.f32 %v306, 0.041655596
    %v308 = vmul.f32 %v305, %v307
    %v309 = vadd.f32 %v308, -0.4999988
    %v310 = vmul.f32 %v305, %v309
    %v311 = vadd.f32 1.0, %v310
    %v312 = vmul.f32 %v303, %v303
    %v313 = vmul.f32 %v312, -0.00019511016
    %v314 = vadd.f32 %v313, 0.008332121
    %v315 = vmul.f32 %v312, %v314
    %v316 = vadd.f32 %v315, -0.16666654
    %v317 = vmul.f32 %v312, %v316
    %v318 = vadd.f32 %v317, 1.0
    %v319 = vmul.f32 %v318, %v303
    %vm320 = vweird.f32 %v22
    %v321 = vadd.s32 %v304, 3
    %v322 = vand.u32 %v321, 3
    %vm323 = vcmp.lt.s32.totalorder %v322, 2
    %vm324 = vcmp.eq.s32.totalorder %v322, 0
    %v325 = vxor.u32 %v319, 2147483648
    %v326 = vsel %vm324, %v311, %v325
    %vm327 = vcmp.eq.s32.totalorder %v322, 2
    %v328 = vxor.u32 %v311, 2147483648
    %v329 = vsel %vm327, %v328, %v319
    %v330 = vsel %vm323, %v326, %v329
    %v331 = vsel %vm320, nan, %v330
    %333 = vrot.lane.b32.xlu0 %v331, 16
    %v334 = vpop.permute.xlu0 %333
    %vm336 = vcmask 130048
    %v337 = vsel %vm336, %v176, %v334
    %vm338 = vcmask 261120
    %339 = vst.msk [vmem:[#allocation2] sm:$0xff] %vm338, %v337
    // Predicated region
    $region10: #{tpu_custom_call.1} parent=1 // pred_check
      _
    $region11: #{tpu_custom_call.1} parent=1 // pred_check_branch
      %341 = sbr.rel (0) target = $region13
    $region12: #{tpu_custom_call.1} parent=1 // pred_region
      %343 = vsyncadd [#allocation3], 0
      %s345 = sshll.u32 [#allocation2], 4
      %s346 = int_to_ptr.vmem [resolvable:$true] %s345
      %s347 = sshll.u32 %s2, 4
      %s348 = int_to_ptr.hbm [resolvable:$true] %s347
      %350 = dma.vmem_to_hbm [thread:$0]  %s346, 128, %s348, [#allocation3]
    $region13: #{tpu_custom_call.1} parent=1 // pred_fallthru
      _
    // Predicated region
    $region14: #{tpu_custom_call.1} parent=1 // pred_check
      _
    $region15: #{tpu_custom_call.1} parent=1 // pred_check_branch
      %352 = sbr.rel (0) target = $region17
    $region16: #{tpu_custom_call.1} parent=1 // pred_region
      %354 = dma.done [#allocation3], 128
    $region17: #{tpu_custom_call.1} parent=1 // pred_fallthru
      _
    %355 = vsyncpa [#allocation3], 1

</llo_original>
